<compile_context>
chip_gen: v6e
topology: v6e:2x2x1
jax: 0.10.0
libtpu: 0.0.40
codegen_flags: <defaults>
</compile_context>

<pallas_src>
import functools

import jax
import jax.numpy as jnp
from jax.experimental import pallas as pl
from jax.experimental.pallas import tpu as pltpu


# ----------------------------------------------------------------------------
# Fused kernel: L stacked LSTM cells (one timestep) + ReLU + BatchNorm1d.
#   refs = (x, hc0, w_0..w_{L-1}, b_0..b_{L-1}, gamma, beta, out_slab)
#   hc0  packs [h0_l0 .. h0_l{L-1}, c0_l0 .. c0_l{L-1}] along lanes: (B, 2*L*H)
#   out  packs [bn_out, h_n_l0.., c_n_l0.., zero-pad] along lanes: (B, slab_w)
# ----------------------------------------------------------------------------
def _bn_encoder_kernel(num_layers, hidden_size, *refs):
    x_ref, hc_ref = refs[0], refs[1]
    w_refs = refs[2:2 + num_layers]
    b_refs = refs[2 + num_layers:2 + 2 * num_layers]
    gamma_ref = refs[2 + 2 * num_layers]
    beta_ref = refs[2 + 2 * num_layers + 1]
    out_ref = refs[2 + 2 * num_layers + 2]

    H = hidden_size
    B = x_ref.shape[0]

    x = x_ref[...]                       # (B, D_in)
    hc = hc_ref[...]                     # (B, 2*L*H) packed h0 then c0

    # Lane mask selecting the g-gate region (lanes 2H..3H) of the (B,4H) tile.
    # Computed once, reused for every layer.
    lane = jax.lax.broadcasted_iota(jnp.int32, (B, 4 * H), 1)
    is_g = jnp.logical_and(lane >= 2 * H, lane < 3 * H)

    layer_in = x
    h_new, c_new = [], []
    for l in range(num_layers):          # unrolled at trace time
        h_prev = hc[:, l * H:(l + 1) * H]                              # (B, H)
        c_prev = hc[:, (num_layers + l) * H:(num_layers + l + 1) * H]  # (B, H)

        # Single fused matmul: [x | h] @ [W_ih^T ; W_hh^T]  -> (B, 4H)
        xh = jnp.concatenate([layer_in, h_prev], axis=-1)
        gates = (jnp.dot(xh, w_refs[l][...],
                         preferred_element_type=jnp.float32)
                 + b_refs[l][...])

        # Full-tile transcendentals + mask, then slice the activated tile.
        sig = jax.nn.sigmoid(gates)
        th = jnp.tanh(gates)
        act = jnp.where(is_g, th, sig)   # (B, 4H): i, f, g, o already activated

        i_g = act[:, 0 * H:1 * H]
        f_g = act[:, 1 * H:2 * H]
        g_g = act[:, 2 * H:3 * H]
        o_g = act[:, 3 * H:4 * H]

        c_l = f_g * c_prev + i_g * g_g
        h_l = o_g * jnp.tanh(c_l)
        h_new.append(h_l)
        c_new.append(c_l)
        layer_in = h_l

    # ReLU + BatchNorm1d (training mode: batch stats, biased variance, eps=1e-5).
    y = jnp.maximum(layer_in, 0.0)
    inv_b = jnp.float32(1.0 / B)
    mean = jnp.sum(y, axis=0, keepdims=True) * inv_b
    yc = y - mean
    var = jnp.sum(yc * yc, axis=0, keepdims=True) * inv_b
    bn = gamma_ref[...] * yc * jax.lax.rsqrt(var + 1e-5) + beta_ref[...]

    # Single lane-dense store of everything.
    pieces = [bn] + h_new + c_new
    used = (2 * num_layers + 1) * H
    slab_w = out_ref.shape[-1]
    if slab_w > used:
        pieces.append(jnp.zeros((B, slab_w - used), jnp.float32))
    out_ref[...] = jnp.concatenate(pieces, axis=-1)


def _round_up(x, m):
    return (x + m - 1) // m * m


# ----------------------------------------------------------------------------
# BNEncoder forward: one pallas_call, wrapper only packs/unpacks lane slabs.
# ----------------------------------------------------------------------------
@jax.jit
def bn_encoder_forward(x, h0, c0, params):
    """x: (B, 1, D) batch-first; h0, c0: (num_layers, B, H).
    Returns (output (B, 1, H), (h_n, c_n))."""
    ws, bs = params["w"], params["b"]
    gamma, beta = params["gamma"], params["beta"]
    L = len(ws)
    H = gamma.shape[-1]
    B = x.shape[0]

    xt = x[:, 0, :]                      # T == 1 (forward squeezes dim 1)
    # Pack initial hidden/cell states into one lane-dense (B, 2*L*H) slab.
    hc0 = jnp.concatenate([h0[l] for l in range(L)]
                          + [c0[l] for l in range(L)], axis=-1)

    slab_w = _round_up((2 * L + 1) * H, 128)
    kernel = functools.partial(_bn_encoder_kernel, L, H)
    slab = pl.pallas_call(
        kernel,
        out_shape=jax.ShapeDtypeStruct((B, slab_w), jnp.float32),
        compiler_params=pltpu.CompilerParams(vmem_limit_bytes=2 * 1024 * 1024),
    )(xt, hc0, *ws, *bs, gamma, beta)

    out = slab[:, 0:H]
    h_n = jnp.stack([slab[:, (1 + l) * H:(2 + l) * H] for l in range(L)])
    c_n = jnp.stack([slab[:, (1 + L + l) * H:(2 + L + l) * H] for l in range(L)])
    return out[:, None, :], (h_n, c_n)


# ----------------------------------------------------------------------------
# Parameter init (PyTorch-style uniform(-1/sqrt(H), 1/sqrt(H)); weights fused).
# ----------------------------------------------------------------------------
def init_params(key, input_size, hidden_size, num_layers):
    ws, bs = [], []
    bound = hidden_size ** -0.5
    for layer in range(num_layers):
        d_in = input_size if layer == 0 else hidden_size
        key, k1, k2, k3, k4 = jax.random.split(key, 5)
        w_ih = jax.random.uniform(k1, (4 * hidden_size, d_in),
                                  minval=-bound, maxval=bound, dtype=jnp.float32)
        w_hh = jax.random.uniform(k2, (4 * hidden_size, hidden_size),
                                  minval=-bound, maxval=bound, dtype=jnp.float32)
        b_ih = jax.random.uniform(k3, (4 * hidden_size,),
                                  minval=-bound, maxval=bound, dtype=jnp.float32)
        b_hh = jax.random.uniform(k4, (4 * hidden_size,),
                                  minval=-bound, maxval=bound, dtype=jnp.float32)
        # Fused weight: (d_in + H, 4H) = [W_ih^T ; W_hh^T]
        ws.append(jnp.concatenate([w_ih.T, w_hh.T], axis=0))
        bs.append((b_ih + b_hh).reshape(1, 4 * hidden_size))
    # BatchNorm1d default init: gamma=1, beta=0
    gamma = jnp.ones((1, hidden_size), jnp.float32)
    beta = jnp.zeros((1, hidden_size), jnp.float32)
    return {"w": ws, "b": bs, "gamma": gamma, "beta": beta}


# ----------------------------------------------------------------------------
# Pure-JAX reference (mirrors torch.nn.LSTM/ReLU/BatchNorm1d semantics).
# ----------------------------------------------------------------------------
def reference_forward(x, h0, c0, params):
    xt = x[:, 0, :]
    H = params["gamma"].shape[-1]
    layer_in = xt
    h_list, c_list = [], []
    for l, (w, b) in enumerate(zip(params["w"], params["b"])):
        d_in = layer_in.shape[-1]
        w_ih_t, w_hh_t = w[:d_in], w[d_in:]
        gates = layer_in @ w_ih_t + h0[l] @ w_hh_t + b
        i = jax.nn.sigmoid(gates[:, :H])
        f = jax.nn.sigmoid(gates[:, H:2 * H])
        g = jnp.tanh(gates[:, 2 * H:3 * H])
        o = jax.nn.sigmoid(gates[:, 3 * H:])
        c_new = f * c0[l] + i * g
        h_new = o * jnp.tanh(c_new)
        h_list.append(h_new)
        c_list.append(c_new)
        layer_in = h_new
    y = jnp.maximum(layer_in, 0.0)
    mean = jnp.mean(y, axis=0, keepdims=True)
    var = jnp.mean((y - mean) ** 2, axis=0, keepdims=True)
    out = params["gamma"] * (y - mean) * jax.lax.rsqrt(var + 1e-5) + params["beta"]
    return out[:, None, :], (jnp.stack(h_list), jnp.stack(c_list))


if __name__ == "__main__":
    INPUT_SIZE, HIDDEN_SIZE, HIDDEN_LAYER = 16, 32, 2
    MINI_BATCH, WINDOW_SIZE, BIDIR = 8, 1, False
    # TODO(synk): BIDIR=True (bidirectional LSTM) not implemented in the fused kernel.

    key = jax.random.PRNGKey(0)
    key, kx = jax.random.split(key)
    params = init_params(key, INPUT_SIZE, HIDDEN_SIZE, HIDDEN_LAYER)

    x = jax.random.normal(kx, (MINI_BATCH, WINDOW_SIZE, INPUT_SIZE), jnp.float32)
    # initHidden: zeros of shape (hidden_layer, mini_batch, hidden_size)
    h0 = jnp.zeros((HIDDEN_LAYER, MINI_BATCH, HIDDEN_SIZE), jnp.float32)
    c0 = jnp.zeros((HIDDEN_LAYER, MINI_BATCH, HIDDEN_SIZE), jnp.float32)

    (out, (h_n, c_n)) = bn_encoder_forward(x, h0, c0, params)
    jax.block_until_ready((out, h_n, c_n))

    (out_ref, (h_ref, c_ref)) = reference_forward(x, h0, c0, params)
    assert out.shape == (MINI_BATCH, 1, HIDDEN_SIZE)
    assert h_n.shape == (HIDDEN_LAYER, MINI_BATCH, HIDDEN_SIZE)
    assert c_n.shape == (HIDDEN_LAYER, MINI_BATCH, HIDDEN_SIZE)
    assert jnp.allclose(out, out_ref, atol=1e-5, rtol=1e-5)
    assert jnp.allclose(h_n, h_ref, atol=1e-5, rtol=1e-5)
    assert jnp.allclose(c_n, c_ref, atol=1e-5, rtol=1e-5)

    print("KERNEL_OK")
</pallas_src>

<mosaic_0001>
module attributes {stable_mosaic.version = 11 : i64} {
  func.func @_bn_encoder_kernel(%arg0: memref<8x16xf32, #tpu.memory_space<vmem>>, %arg1: memref<8x128xf32, #tpu.memory_space<vmem>>, %arg2: memref<48x128xf32, #tpu.memory_space<vmem>>, %arg3: memref<64x128xf32, #tpu.memory_space<vmem>>, %arg4: memref<1x128xf32, #tpu.memory_space<vmem>>, %arg5: memref<1x128xf32, #tpu.memory_space<vmem>>, %arg6: memref<1x32xf32, #tpu.memory_space<vmem>>, %arg7: memref<1x32xf32, #tpu.memory_space<vmem>>, %arg8: memref<8x256xf32, #tpu.memory_space<vmem>>) attributes {dimension_semantics = [], scalar_prefetch = 0 : i64, scratch_operands = 0 : i64, tpu.core_type = #tpu.core_type<tc>} {
    %c0 = arith.constant 0 : index
    %c0_0 = arith.constant 0 : index
    %0 = vector.load %arg0[%c0, %c0_0] : memref<8x16xf32, #tpu.memory_space<vmem>>, vector<8x16xf32>
    %c0_1 = arith.constant 0 : index
    %c0_2 = arith.constant 0 : index
    %1 = vector.load %arg1[%c0_1, %c0_2] : memref<8x128xf32, #tpu.memory_space<vmem>>, vector<8x128xf32>
    %2 = tpu.iota {dimensions = array<i32: 1>} : vector<8x128xi32>
    %c64_i32 = arith.constant 64 : i32
    %3 = vector.broadcast %c64_i32 : i32 to vector<8x128xi32>
    %4 = arith.cmpi sge, %2, %3 : vector<8x128xi32>
    %c96_i32 = arith.constant 96 : i32
    %5 = vector.broadcast %c96_i32 : i32 to vector<8x128xi32>
    %6 = arith.cmpi slt, %2, %5 : vector<8x128xi32>
    %7 = arith.andi %4, %6 : vector<8x128xi1>
    %8 = vector.extract_strided_slice %1 {offsets = [0, 0], sizes = [8, 32], strides = [1, 1]} : vector<8x128xf32> to vector<8x32xf32>
    %9 = vector.extract_strided_slice %1 {offsets = [0, 64], sizes = [8, 32], strides = [1, 1]} : vector<8x128xf32> to vector<8x32xf32>
    %10 = tpu.concatenate %0, %8 in 1 : vector<8x16xf32>, vector<8x32xf32> -> vector<8x48xf32>
    %c0_3 = arith.constant 0 : index
    %c0_4 = arith.constant 0 : index
    %11 = vector.load %arg2[%c0_3, %c0_4] : memref<48x128xf32, #tpu.memory_space<vmem>>, vector<48x128xf32>
    %cst = arith.constant dense<0.000000e+00> : vector<8x128xf32>
    %12 = tpu.matmul %10, %11, %cst {dimension_numbers = #tpu.dot_dimension_numbers<[1], [0], [0], [1], [0, 0, 1, 1], [], []>} : vector<8x48xf32>, vector<48x128xf32>, vector<8x128xf32> -> vector<8x128xf32>
    %c0_5 = arith.constant 0 : index
    %c0_6 = arith.constant 0 : index
    %13 = vector.load %arg4[%c0_5, %c0_6] : memref<1x128xf32, #tpu.memory_space<vmem>>, vector<1x128xf32>
    %14 = vector.broadcast %13 : vector<1x128xf32> to vector<8x128xf32>
    %15 = arith.addf %12, %14 : vector<8x128xf32>
    %16 = arith.negf %15 : vector<8x128xf32>
    %17 = math.exp %16 : vector<8x128xf32>
    %cst_7 = arith.constant 1.000000e+00 : f32
    %18 = vector.broadcast %cst_7 : f32 to vector<8x128xf32>
    %19 = arith.addf %18, %17 : vector<8x128xf32>
    %20 = arith.divf %18, %19 : vector<8x128xf32>
    %21 = math.tanh %15 : vector<8x128xf32>
    %22 = arith.select %7, %21, %20 : vector<8x128xi1>, vector<8x128xf32>
    %23 = vector.extract_strided_slice %22 {offsets = [0, 0], sizes = [8, 32], strides = [1, 1]} : vector<8x128xf32> to vector<8x32xf32>
    %24 = vector.extract_strided_slice %22 {offsets = [0, 32], sizes = [8, 32], strides = [1, 1]} : vector<8x128xf32> to vector<8x32xf32>
    %25 = vector.extract_strided_slice %22 {offsets = [0, 64], sizes = [8, 32], strides = [1, 1]} : vector<8x128xf32> to vector<8x32xf32>
    %26 = vector.extract_strided_slice %22 {offsets = [0, 96], sizes = [8, 32], strides = [1, 1]} : vector<8x128xf32> to vector<8x32xf32>
    %27 = arith.mulf %24, %9 : vector<8x32xf32>
    %28 = arith.mulf %23, %25 : vector<8x32xf32>
    %29 = arith.addf %27, %28 : vector<8x32xf32>
    %30 = math.tanh %29 : vector<8x32xf32>
    %31 = arith.mulf %26, %30 : vector<8x32xf32>
    %32 = vector.extract_strided_slice %1 {offsets = [0, 32], sizes = [8, 32], strides = [1, 1]} : vector<8x128xf32> to vector<8x32xf32>
    %33 = vector.extract_strided_slice %1 {offsets = [0, 96], sizes = [8, 32], strides = [1, 1]} : vector<8x128xf32> to vector<8x32xf32>
    %34 = tpu.concatenate %31, %32 in 1 : vector<8x32xf32>, vector<8x32xf32> -> vector<8x64xf32>
    %c0_8 = arith.constant 0 : index
    %c0_9 = arith.constant 0 : index
    %35 = vector.load %arg3[%c0_8, %c0_9] : memref<64x128xf32, #tpu.memory_space<vmem>>, vector<64x128xf32>
    %cst_10 = arith.constant dense<0.000000e+00> : vector<8x128xf32>
    %36 = tpu.matmul %34, %35, %cst_10 {dimension_numbers = #tpu.dot_dimension_numbers<[1], [0], [0], [1], [0, 0, 1, 1], [], []>} : vector<8x64xf32>, vector<64x128xf32>, vector<8x128xf32> -> vector<8x128xf32>
    %c0_11 = arith.constant 0 : index
    %c0_12 = arith.constant 0 : index
    %37 = vector.load %arg5[%c0_11, %c0_12] : memref<1x128xf32, #tpu.memory_space<vmem>>, vector<1x128xf32>
    %38 = vector.broadcast %37 : vector<1x128xf32> to vector<8x128xf32>
    %39 = arith.addf %36, %38 : vector<8x128xf32>
    %40 = arith.negf %39 : vector<8x128xf32>
    %41 = math.exp %40 : vector<8x128xf32>
    %cst_13 = arith.constant 1.000000e+00 : f32
    %42 = vector.broadcast %cst_13 : f32 to vector<8x128xf32>
    %43 = arith.addf %42, %41 : vector<8x128xf32>
    %44 = arith.divf %42, %43 : vector<8x128xf32>
    %45 = math.tanh %39 : vector<8x128xf32>
    %46 = arith.select %7, %45, %44 : vector<8x128xi1>, vector<8x128xf32>
    %47 = vector.extract_strided_slice %46 {offsets = [0, 0], sizes = [8, 32], strides = [1, 1]} : vector<8x128xf32> to vector<8x32xf32>
    %48 = vector.extract_strided_slice %46 {offsets = [0, 32], sizes = [8, 32], strides = [1, 1]} : vector<8x128xf32> to vector<8x32xf32>
    %49 = vector.extract_strided_slice %46 {offsets = [0, 64], sizes = [8, 32], strides = [1, 1]} : vector<8x128xf32> to vector<8x32xf32>
    %50 = vector.extract_strided_slice %46 {offsets = [0, 96], sizes = [8, 32], strides = [1, 1]} : vector<8x128xf32> to vector<8x32xf32>
    %51 = arith.mulf %48, %33 : vector<8x32xf32>
    %52 = arith.mulf %47, %49 : vector<8x32xf32>
    %53 = arith.addf %51, %52 : vector<8x32xf32>
    %54 = math.tanh %53 : vector<8x32xf32>
    %55 = arith.mulf %50, %54 : vector<8x32xf32>
    %cst_14 = arith.constant 0.000000e+00 : f32
    %56 = vector.broadcast %cst_14 : f32 to vector<8x32xf32>
    %57 = arith.maximumf %55, %56 : vector<8x32xf32>
    %cst_15 = arith.constant dense<0.000000e+00> : vector<32xf32>
    %58 = vector.multi_reduction <add>, %57, %cst_15 [0] : vector<8x32xf32> to vector<32xf32>
    %59 = vector.shape_cast %58 : vector<32xf32> to vector<1x32xf32>
    %cst_16 = arith.constant 1.250000e-01 : f32
    %60 = vector.broadcast %cst_16 : f32 to vector<1x32xf32>
    %61 = arith.mulf %59, %60 : vector<1x32xf32>
    %62 = vector.broadcast %61 : vector<1x32xf32> to vector<8x32xf32>
    %63 = arith.subf %57, %62 : vector<8x32xf32>
    %64 = arith.mulf %63, %63 : vector<8x32xf32>
    %cst_17 = arith.constant dense<0.000000e+00> : vector<32xf32>
    %65 = vector.multi_reduction <add>, %64, %cst_17 [0] : vector<8x32xf32> to vector<32xf32>
    %66 = vector.shape_cast %65 : vector<32xf32> to vector<1x32xf32>
    %cst_18 = arith.constant 1.250000e-01 : f32
    %67 = vector.broadcast %cst_18 : f32 to vector<1x32xf32>
    %68 = arith.mulf %66, %67 : vector<1x32xf32>
    %c0_19 = arith.constant 0 : index
    %c0_20 = arith.constant 0 : index
    %69 = vector.load %arg6[%c0_19, %c0_20] : memref<1x32xf32, #tpu.memory_space<vmem>>, vector<1x32xf32>
    %70 = vector.broadcast %69 : vector<1x32xf32> to vector<8x32xf32>
    %71 = arith.mulf %70, %63 : vector<8x32xf32>
    %cst_21 = arith.constant 9.99999974E-6 : f32
    %72 = vector.broadcast %cst_21 : f32 to vector<1x32xf32>
    %73 = arith.addf %68, %72 : vector<1x32xf32>
    %74 = math.rsqrt %73 : vector<1x32xf32>
    %75 = vector.broadcast %74 : vector<1x32xf32> to vector<8x32xf32>
    %76 = arith.mulf %71, %75 : vector<8x32xf32>
    %c0_22 = arith.constant 0 : index
    %c0_23 = arith.constant 0 : index
    %77 = vector.load %arg7[%c0_22, %c0_23] : memref<1x32xf32, #tpu.memory_space<vmem>>, vector<1x32xf32>
    %78 = vector.broadcast %77 : vector<1x32xf32> to vector<8x32xf32>
    %79 = arith.addf %76, %78 : vector<8x32xf32>
    %cst_24 = arith.constant 0.000000e+00 : f32
    %80 = vector.broadcast %cst_24 : f32 to vector<8x96xf32>
    %81 = tpu.concatenate %79, %31, %55, %29, %53, %80 in 1 : vector<8x32xf32>, vector<8x32xf32>, vector<8x32xf32>, vector<8x32xf32>, vector<8x32xf32>, vector<8x96xf32> -> vector<8x256xf32>
    %c0_25 = arith.constant 0 : index
    %c0_26 = arith.constant 0 : index
    %82 = vector.load %arg8[%c0_25, %c0_26] : memref<8x256xf32, #tpu.memory_space<vmem>>, vector<8x256xf32>
    tpu.vector_store %arg8[%c0_25, %c0_26], %81 {strides = array<i32>} : memref<8x256xf32, #tpu.memory_space<vmem>>, vector<8x256xf32>,
    return
  }
}

</mosaic_0001>

<llo_original>
// kernel: bn_encoder_forward.1
$region0: #{bn_encoder_forward.1}
  #allocation0 [shape = 'u32[]', space=smem, size = 0x4, offset = 0x4, fixed_abs, tag = 'smem constant byte address 0x4 - core index']
  #allocation1 [shape = 'u32[144,128]{1,0:T(1,128)}', space=vmem, size = 0x12000, scoped, tag = 'internal scratch']
  %s0 = inlined_call_operand.vmem [shape: f32[8,16], index: 0, kind: input, shape index: {}]
  %s1 = inlined_call_operand.vmem [shape: f32[8,128], index: 1, kind: input, shape index: {}]
  %s2 = inlined_call_operand.vmem [shape: f32[48,128], index: 2, kind: input, shape index: {}]
  %s3 = inlined_call_operand.vmem [shape: f32[64,128], index: 3, kind: input, shape index: {}]
  %s4 = inlined_call_operand.vmem [shape: f32[1,128], index: 4, kind: input, shape index: {}]
  %s5 = inlined_call_operand.vmem [shape: f32[1,128], index: 5, kind: input, shape index: {}]
  %s6 = inlined_call_operand.vmem [shape: f32[1,32], index: 6, kind: input, shape index: {}]
  %s7 = inlined_call_operand.vmem [shape: f32[1,32], index: 7, kind: input, shape index: {}]
  %s8 = inlined_call_operand.vmem [shape: f32[8,256], index: 8, kind: output, shape index: {}]
  %s9 = sld [smem:[#allocation0]]
  $region42: #{bn_encoder_forward.1} parent=0
    _
  %s11 = ssub.s32 1, %s9
  %s12 = scalar_select 0, %s11, %s9
  // Predicated region
  $region2: #{bn_encoder_forward.1} parent=0 // pred_check
    _
  $region3: #{bn_encoder_forward.1} parent=0 // pred_check_branch
    %14 = sbr.rel (0) target = $region5
  $region4: #{bn_encoder_forward.1} parent=0 // pred_region
    _
  $region5: #{bn_encoder_forward.1} parent=0 // pred_fallthru
    _
  // Predicated region
  $region6: #{bn_encoder_forward.1} parent=0 // pred_check
    _
  $region7: #{bn_encoder_forward.1} parent=0 // pred_check_branch
    %16 = sbr.rel (0) target = $region9
  $region8: #{bn_encoder_forward.1} parent=0 // pred_region
    _
  $region9: #{bn_encoder_forward.1} parent=0 // pred_fallthru
    _
  // Predicated region
  $region10: #{bn_encoder_forward.1} parent=0 // pred_check
    _
  $region11: #{bn_encoder_forward.1} parent=0 // pred_check_branch
    %18 = sbr.rel (0) target = $region13
  $region12: #{bn_encoder_forward.1} parent=0 // pred_region
    _
  $region13: #{bn_encoder_forward.1} parent=0 // pred_fallthru
    _
  // Predicated region
  $region14: #{bn_encoder_forward.1} parent=0 // pred_check
    _
  $region15: #{bn_encoder_forward.1} parent=0 // pred_check_branch
    %20 = sbr.rel (0) target = $region17
  $region16: #{bn_encoder_forward.1} parent=0 // pred_region
    _
  $region17: #{bn_encoder_forward.1} parent=0 // pred_fallthru
    _
  // Predicated region
  $region18: #{bn_encoder_forward.1} parent=0 // pred_check
    _
  $region19: #{bn_encoder_forward.1} parent=0 // pred_check_branch
    %22 = sbr.rel (0) target = $region21
  $region20: #{bn_encoder_forward.1} parent=0 // pred_region
    _
  $region21: #{bn_encoder_forward.1} parent=0 // pred_fallthru
    _
  // Predicated region
  $region22: #{bn_encoder_forward.1} parent=0 // pred_check
    _
  $region23: #{bn_encoder_forward.1} parent=0 // pred_check_branch
    %24 = sbr.rel (0) target = $region25
  $region24: #{bn_encoder_forward.1} parent=0 // pred_region
    _
  $region25: #{bn_encoder_forward.1} parent=0 // pred_fallthru
    _
  // Predicated region
  $region26: #{bn_encoder_forward.1} parent=0 // pred_check
    _
  $region27: #{bn_encoder_forward.1} parent=0 // pred_check_branch
    %26 = sbr.rel (0) target = $region29
  $region28: #{bn_encoder_forward.1} parent=0 // pred_region
    _
  $region29: #{bn_encoder_forward.1} parent=0 // pred_fallthru
    _
  // Predicated region
  $region30: #{bn_encoder_forward.1} parent=0 // pred_check
    _
  $region31: #{bn_encoder_forward.1} parent=0 // pred_check_branch
    %28 = sbr.rel (0) target = $region33
  $region32: #{bn_encoder_forward.1} parent=0 // pred_region
    _
  $region33: #{bn_encoder_forward.1} parent=0 // pred_fallthru
    _
  %v29 = vld [vmem:[%s0] sm:$0xff]
  %v30 = vld [vmem:[%s1] sm:$0xff]
  %v31 = vlaneseq
  %v32 = vand.u32 %v31, 127
  %vm33 = vcmp.ge.s32.totalorder %v32, 64
  %vm34 = vcmp.lt.s32.totalorder %v32, 96
  %vm35 = vmand %vm33, %vm34
  %37 = vrot.lane.b32.xlu0 %v30, 16
  %v38 = vpop.permute.xlu0 %37
  %vm40 = vcmask 130048
  %v41 = vsel %vm40, %v29, %v38
  %v42 = vld [vmem:[%s2] sm:$0xff]
  %v43 = vld [vmem:[%s2 + $0x8] sm:$0xff]
  %v44 = vld [vmem:[%s2 + $0x10] sm:$0xff]
  %v45 = vld [vmem:[%s2 + $0x18] sm:$0xff]
  %v46 = vld [vmem:[%s2 + $0x20] sm:$0xff]
  %v47 = vld [vmem:[%s2 + $0x28] sm:$0xff]
  %v48 = vld [vmem:[%s4] sm:$0x1]
  %v50 = vlaneseq
  %v51 = vshrl.u32 %v50, 7
  %v52 = vsub.s32 0, %v51
  %v53 = vrot.slane %v48, %v52
  %vm55 = vcmask 392192
  %v57 = vsel %vm55, %v41, 0
  %59 = vmatprep.subr.mxu0 0.0
  %60 = vmatpush1.msra.mxu0 0.0
  %61 = vmatprep.subr.mxu0 0.0
  %62 = vmatpush1.msra.mxu0 0.0
  %63 = vmatprep.subr.mxu0 0.0
  %64 = vmatpush1.msra.mxu0 0.0
  %65 = vmatprep.subr.mxu0 0.0
  %66 = vmatpush1.msra.mxu0 0.0
  %67 = vmatprep.subr.mxu0 0.0
  %68 = vmatpush1.msra.mxu0 0.0
  %69 = vmatprep.subr.mxu0 0.0
  %70 = vmatpush1.msra.mxu0 0.0
  %71 = vmatprep.subr.mxu0 0.0
  %72 = vmatpush1.msra.mxu0 0.0
  %73 = vmatprep.subr.mxu0 0.0
  %74 = vmatpush1.msra.mxu0 0.0
  %75 = vmatprep.subr.mxu0 0.0
  %76 = vmatpush1.msra.mxu0 0.0
  %77 = vmatprep.subr.mxu0 0.0
  %78 = vmatpush1.msra.mxu0 0.0
  %79 = vmatprep.subr.mxu0 0.0
  %80 = vmatpush1.msra.mxu0 %v47
  %81 = vmatprep.subr.mxu0 0.0
  %82 = vmatpush1.msra.mxu0 %v46
  %83 = vmatprep.subr.mxu0 0.0
  %84 = vmatpush1.msra.mxu0 %v45
  %85 = vmatprep.subr.mxu0 0.0
  %86 = vmatpush1.msra.mxu0 %v44
  %87 = vmatprep.subr.mxu0 0.0
  %88 = vmatpush1.msra.mxu0 %v43
  %89 = vmatprep.subr.mxu0 0.0
  %90 = vmatpush1.msra.mxu0 %v42
  %91 = vmatprep.subr.mxu0 0.0
  %92 = vmatpush2.msra.mxu0 0.0
  %93 = vmatprep.subr.mxu0 0.0
  %94 = vmatpush2.msra.mxu0 0.0
  %95 = vmatprep.subr.mxu0 0.0
  %96 = vmatpush2.msra.mxu0 0.0
  %97 = vmatprep.subr.mxu0 0.0
  %98 = vmatpush2.msra.mxu0 0.0
  %99 = vmatprep.subr.mxu0 0.0
  %100 = vmatpush2.msra.mxu0 0.0
  %101 = vmatprep.subr.mxu0 0.0
  %102 = vmatpush2.msra.mxu0 0.0
  %103 = vmatprep.subr.mxu0 0.0
  %104 = vmatpush2.msra.mxu0 0.0
  %105 = vmatprep.subr.mxu0 0.0
  %106 = vmatpush2.msra.mxu0 0.0
  %107 = vmatprep.subr.mxu0 0.0
  %108 = vmatpush2.msra.mxu0 0.0
  %109 = vmatprep.subr.mxu0 0.0
  %110 = vmatpush2.msra.mxu0 0.0
  %111 = vmatprep.subr.mxu0 0.0
  %112 = vmatpush2.msra.mxu0 0.0
  %113 = vmatprep.subr.mxu0 0.0
  %114 = vmatpush2.msra.mxu0 0.0
  %115 = vmatprep.subr.mxu0 0.0
  %116 = vmatpush2.msra.mxu0 0.0
  %117 = vmatprep.subr.mxu0 0.0
  %118 = vmatpush2.msra.mxu0 0.0
  %119 = vmatprep.subr.mxu0 0.0
  %120 = vmatpush2.msra.mxu0 0.0
  %121 = vmatprep.subr.mxu0 0.0
  %122 = vmatpush2.msra.mxu0 0.0
  %123 = vmatprep.mubr.f32.mxu0 0.0
  %124 = vmatmul.mubr.f32.gmra.mxu0 %v57
  %v125 = vpop.f32.mrf.mxu0
  %v126 = vadd.f32 %v53, %v125
  %v127 = vpop.f32.mrf.mxu0
  %128 = vdwg.mxu0
  %v129 = vxor.u32 %v126, 2147483648
  %v130 = vmul.f32 %v129, 1.442695
  %v131 = vpow.pop %v130
  %v132 = vadd.f32 %v131, 1.0
  %v133 = vrcp.pop %v132
  %v134 = vmul.f32 1.0, %v133
  %v135 = vtanh.pop %v126
  %v136 = vsel %vm35, %v135, %v134
  %137 = vrot.lane.b32.xlu0 %v30, 96
  %v138 = vpop.permute.xlu0 %137
  %v140 = vmul.f32 %v136, %v138
  %142 = vrot.lane.b32.xlu0 %v136, 64
  %v143 = vpop.permute.xlu0 %142
  %v145 = vmul.f32 %v136, %v143
  %147 = vrot.lane.b32.xlu0 %v145, 32
  %v148 = vpop.permute.xlu0 %147
  %v150 = vadd.f32 %v140, %v148
  %v151 = vtanh.pop %v150
  %153 = vrot.lane.b32.xlu0 %v151, 64
  %v154 = vpop.permute.xlu0 %153
  %v156 = vmul.f32 %v136, %v154
  %158 = vrot.lane.b32.xlu0 %v156, 32
  %v159 = vpop.permute.xlu0 %158
  %vm161 = vcmask 261120
  %v162 = vsel %vm161, %v159, %v30
  %v163 = vld [vmem:[%s3] sm:$0xff]
  %v164 = vld [vmem:[%s3 + $0x8] sm:$0xff]
  %v165 = vld [vmem:[%s3 + $0x10] sm:$0xff]
  %v166 = vld [vmem:[%s3 + $0x18] sm:$0xff]
  %v167 = vld [vmem:[%s3 + $0x20] sm:$0xff]
  %v168 = vld [vmem:[%s3 + $0x28] sm:$0xff]
  %v169 = vld [vmem:[%s3 + $0x30] sm:$0xff]
  %v170 = vld [vmem:[%s3 + $0x38] sm:$0xff]
  %v171 = vld [vmem:[%s5] sm:$0x1]
  %v173 = vlaneseq
  %v174 = vshrl.u32 %v173, 7
  %v175 = vsub.s32 0, %v174
  %v176 = vrot.slane %v171, %v175
  %vm178 = vcmask 523264
  %v180 = vsel %vm178, %v162, 0
  %182 = vmatprep.subr.mxu0 0.0
  %183 = vmatpush1.msra.mxu0 0.0
  %184 = vmatprep.subr.mxu0 0.0
  %185 = vmatpush1.msra.mxu0 0.0
  %186 = vmatprep.subr.mxu0 0.0
  %187 = vmatpush1.msra.mxu0 0.0
  %188 = vmatprep.subr.mxu0 0.0
  %189 = vmatpush1.msra.mxu0 0.0
  %190 = vmatprep.subr.mxu0 0.0
  %191 = vmatpush1.msra.mxu0 0.0
  %192 = vmatprep.subr.mxu0 0.0
  %193 = vmatpush1.msra.mxu0 0.0
  %194 = vmatprep.subr.mxu0 0.0
  %195 = vmatpush1.msra.mxu0 0.0
  %196 = vmatprep.subr.mxu0 0.0
  %197 = vmatpush1.msra.mxu0 0.0
  %198 = vmatprep.subr.mxu0 0.0
  %199 = vmatpush1.msra.mxu0 %v170
  %200 = vmatprep.subr.mxu0 0.0
  %201 = vmatpush1.msra.mxu0 %v169
  %202 = vmatprep.subr.mxu0 0.0
  %203 = vmatpush1.msra.mxu0 %v168
  %204 = vmatprep.subr.mxu0 0.0
  %205 = vmatpush1.msra.mxu0 %v167
  %206 = vmatprep.subr.mxu0 0.0
  %207 = vmatpush1.msra.mxu0 %v166
  %208 = vmatprep.subr.mxu0 0.0
  %209 = vmatpush1.msra.mxu0 %v165
  %210 = vmatprep.subr.mxu0 0.0
  %211 = vmatpush1.msra.mxu0 %v164
  %212 = vmatprep.subr.mxu0 0.0
  %213 = vmatpush1.msra.mxu0 %v163
  %214 = vmatprep.subr.mxu0 0.0
  %215 = vmatpush2.msra.mxu0 0.0
  %216 = vmatprep.subr.mxu0 0.0
  %217 = vmatpush2.msra.mxu0 0.0
  %218 = vmatprep.subr.mxu0 0.0
  %219 = vmatpush2.msra.mxu0 0.0
  %220 = vmatprep.subr.mxu0 0.0
  %221 = vmatpush2.msra.mxu0 0.0
  %222 = vmatprep.subr.mxu0 0.0
  %223 = vmatpush2.msra.mxu0 0.0
  %224 = vmatprep.subr.mxu0 0.0
  %225 = vmatpush2.msra.mxu0 0.0
  %226 = vmatprep.subr.mxu0 0.0
  %227 = vmatpush2.msra.mxu0 0.0
  %228 = vmatprep.subr.mxu0 0.0
  %229 = vmatpush2.msra.mxu0 0.0
  %230 = vmatprep.subr.mxu0 0.0
  %231 = vmatpush2.msra.mxu0 0.0
  %232 = vmatprep.subr.mxu0 0.0
  %233 = vmatpush2.msra.mxu0 0.0
  %234 = vmatprep.subr.mxu0 0.0
  %235 = vmatpush2.msra.mxu0 0.0
  %236 = vmatprep.subr.mxu0 0.0
  %237 = vmatpush2.msra.mxu0 0.0
  %238 = vmatprep.subr.mxu0 0.0
  %239 = vmatpush2.msra.mxu0 0.0
  %240 = vmatprep.subr.mxu0 0.0
  %241 = vmatpush2.msra.mxu0 0.0
  %242 = vmatprep.subr.mxu0 0.0
  %243 = vmatpush2.msra.mxu0 0.0
  %244 = vmatprep.subr.mxu0 0.0
  %245 = vmatpush2.msra.mxu0 0.0
  %246 = vmatprep.mubr.f32.mxu0 0.0
  %247 = vmatmul.mubr.f32.gmra.mxu0 %v180
  %v248 = vpop.f32.mrf.mxu0
  %v249 = vadd.f32 %v176, %v248
  %v250 = vpop.f32.mrf.mxu0
  %251 = vdwg.mxu0
  %v252 = vxor.u32 %v249, 2147483648
  %v253 = vmul.f32 %v252, 1.442695
  %v254 = vpow.pop %v253
  %v255 = vadd.f32 %v254, 1.0
  %v256 = vrcp.pop %v255
  %v257 = vmul.f32 1.0, %v256
  %v258 = vtanh.pop %v249
  %v259 = vsel %vm35, %v258, %v257
  %260 = vrot.lane.b32.xlu0 %v30, 64
  %v261 = vpop.permute.xlu0 %260
  %v263 = vmul.f32 %v259, %v261
  %265 = vrot.lane.b32.xlu0 %v259, 64
  %v266 = vpop.permute.xlu0 %265
  %v268 = vmul.f32 %v259, %v266
  %270 = vrot.lane.b32.xlu0 %v268, 32
  %v271 = vpop.permute.xlu0 %270
  %v273 = vadd.f32 %v263, %v271
  %v274 = vtanh.pop %v273
  %276 = vrot.lane.b32.xlu0 %v274, 64
  %v277 = vpop.permute.xlu0 %276
  %v279 = vmul.f32 %v259, %v277
  %v280 = vmax.f32 %v279, 0.0
  %vm281 = vcmask 1048320
  %v282 = vsel %vm281, %v280, 0.0
  %v283 = vrot.slane %v282, 4
  %v284 = vadd.f32 %v282, %v283
  %v285 = vrot.slane %v284, 2
  %v286 = vadd.f32 %v284, %v285
  %v287 = vrot.slane %v286, 1
  %v288 = vadd.f32 %v286, %v287
  %v289 = vmul.f32 %v288, 0.125
  %v290 = vsub.f32 %v280, %v289
  %v291 = vmul.f32 %v290, %v290
  %v292 = vsel %vm281, %v291, 0.0
  %v293 = vrot.slane %v292, 4
  %v294 = vadd.f32 %v292, %v293
  %v295 = vrot.slane %v294, 2
  %v296 = vadd.f32 %v294, %v295
  %v297 = vrot.slane %v296, 1
  %v298 = vadd.f32 %v296, %v297
  %v299 = vmul.f32 %v298, 0.125
  %v300 = vld [vmem:[%s6] sm:$0x1]
  %v302 = vlaneseq
  %v303 = vshrl.u32 %v302, 7
  %v304 = vsub.s32 0, %v303
  %v305 = vrot.slane %v300, %v304
  %308 = vrot.lane.b32.xlu0 %v290, 32
  %v309 = vpop.permute.xlu0 %308
  %v311 = vmul.f32 %v305, %v309
  %v312 = vadd.f32 %v299, 1e-05
  %v313 = vrsqrt.pop %v312
  %315 = vrot.lane.b32.xlu0 %v313, 32
  %v316 = vpop.permute.xlu0 %315
  %v318 = vmul.f32 %v311, %v316
  %v319 = vld [vmem:[%s7] sm:$0x1]
  %v321 = vlaneseq
  %v322 = vshrl.u32 %v321, 7
  %v323 = vsub.s32 0, %v322
  %v324 = vrot.slane %v319, %v323
  %v326 = vadd.f32 %v318, %v324
  %327 = vrot.lane.b32.xlu0 %v156, 64
  %v328 = vpop.permute.xlu0 %327
  %331 = vrot.lane.b32.xlu0 %v279, 96
  %v332 = vpop.permute.xlu0 %331
  %335 = vrot.lane.b32.xlu0 %v150, 64
  %v336 = vpop.permute.xlu0 %335
  %339 = vrot.lane.b32.xlu0 %v273, 96
  %v340 = vpop.permute.xlu0 %339
  %v342 = vsel %vm161, %v326, %v328
  %v343 = vsel %vm178, %v342, %v332
  %vm344 = vcmask 785408
  %v345 = vsel %vm344, %v343, %v336
  %v346 = vsel %vm161, %v340, 0.0
  %347 = vst [vmem:[%s8] sm:$0xff] %v345
  %348 = vst [vmem:[%s8 + $0x8] sm:$0xff] %v346
  // Predicated region
  $region34: #{bn_encoder_forward.1} parent=0 // pred_check
    _
  $region35: #{bn_encoder_forward.1} parent=0 // pred_check_branch
    %350 = sbr.rel (0) target = $region37
  $region36: #{bn_encoder_forward.1} parent=0 // pred_region
    _
  $region37: #{bn_encoder_forward.1} parent=0 // pred_fallthru
    _
  // Predicated region
  $region38: #{bn_encoder_forward.1} parent=0 // pred_check
    _
  $region39: #{bn_encoder_forward.1} parent=0 // pred_check_branch
    %352 = sbr.rel (0) target = $region41
  $region40: #{bn_encoder_forward.1} parent=0 // pred_region
    _
  $region41: #{bn_encoder_forward.1} parent=0 // pred_fallthru
    _

</llo_original>
